<compile_context>
chip_gen: v6e
topology: v6e:2x2x1
jax: 0.10.0
libtpu: 0.0.40
codegen_flags: <defaults>
</compile_context>

<pallas_src>
import math

import jax
import jax.numpy as jnp
from jax.experimental import pallas as pl
from jax.experimental.pallas import tpu as pltpu


def _identity_kernel(x_ref, o_ref):
    # Pure elementwise pass-through of the current VMEM tile.
    o_ref[...] = x_ref[...]


_SMALL_BYTES = 256 * 1024              # below this: single-block path
_TARGET_TILE_BYTES = 2 * 1024 * 1024   # ~2 MiB per buffer per grid step


def _identity_call(x2, grid, block, index_map):
    return pl.pallas_call(
        _identity_kernel,
        out_shape=jax.ShapeDtypeStruct(x2.shape, x2.dtype),
        grid=grid,
        in_specs=[pl.BlockSpec(block, index_map)],
        out_specs=pl.BlockSpec(block, index_map),
        input_output_aliases={0: 0},  # reuse input buffer when donatable
        compiler_params=pltpu.CompilerParams(
            dimension_semantics=("parallel",),
            vmem_limit_bytes=32 * 1024 * 1024,
        ),
    )(x2)


def straight_through(x: jax.Array) -> jax.Array:
    """Identity forward pass (StraightThrough.forward) via a Pallas copy."""
    orig_shape = x.shape
    dtype = x.dtype
    total = int(math.prod(orig_shape)) if x.ndim > 0 else 1

    if total == 0:
        # Nothing to do for empty tensors.
        return x

    # --- pick a lane-dense 2-D layout: last dim = large multiple of 128 ---
    lane = 0
    for cand in (8192, 4096, 2048, 1024, 512, 256, 128):
        if total % cand == 0:
            lane = cand
            break

    if lane == 0:
        # Odd element count: single 1-D full-extent block (always legal).
        flat = x.reshape(total)
        out = _identity_call(flat, grid=(1,), block=(total,),
                             index_map=lambda i: (0,))
        return out.reshape(orig_shape)

    rows = total // lane
    x2 = x.reshape(rows, lane)

    itemsize = jnp.dtype(dtype).itemsize
    total_bytes = total * itemsize

    if total_bytes <= _SMALL_BYTES or rows <= 8:
        # Single full-array block (full-extent block shapes are always legal).
        grid = (1,)
        block = (rows, lane)
        index_map = lambda i: (0, 0)
    else:
        # Tile over rows; ~2 MiB per buffer, row-tile a multiple of 8.
        tile_r = (_TARGET_TILE_BYTES // (lane * itemsize)) // 8 * 8
        tile_r = max(8, min(rows, int(tile_r)))
        grid = (pl.cdiv(rows, tile_r),)
        block = (tile_r, lane)
        index_map = lambda i: (i, 0)

    out = _identity_call(x2, grid=grid, block=block, index_map=index_map)
    return out.reshape(orig_shape)


if __name__ == "__main__":
    key = jax.random.PRNGKey(0)

    # Small NCHW input consistent with the module: batch=2, C=4, H=W=16.
    x = jax.random.normal(key, (2, 4, 16, 16), dtype=jnp.float32)
    y = straight_through(x)
    jax.block_until_ready(y)
    assert y.shape == x.shape
    assert y.dtype == x.dtype
    assert bool(jnp.all(y == x))

    # Exercise the tiled (grid > 1) lane-dense path on a larger input (8 MiB).
    x_big = jax.random.normal(jax.random.PRNGKey(0), (8, 64, 64, 64),
                              dtype=jnp.float32)
    y_big = straight_through(x_big)
    jax.block_until_ready(y_big)
    assert y_big.shape == x_big.shape
    assert y_big.dtype == x_big.dtype
    assert bool(jnp.all(y_big == x_big))

    # Exercise the odd-size fallback path (105 elements, no 128 factor).
    x_odd = jax.random.normal(jax.random.PRNGKey(0), (3, 5, 7),
                              dtype=jnp.float32)
    y_odd = straight_through(x_odd)
    jax.block_until_ready(y_odd)
    assert y_odd.shape == x_odd.shape
    assert bool(jnp.all(y_odd == x_odd))

    print("KERNEL_OK")
</pallas_src>

<mosaic_0001>
module attributes {stable_mosaic.version = 11 : i64} {
  func.func @_identity_kernel(%arg0: i32, %arg1: memref<1x2048xf32, #tpu.memory_space<vmem>>, %arg2: memref<1x2048xf32, #tpu.memory_space<vmem>>) attributes {dimension_semantics = [#tpu.dimension_semantics<parallel>], iteration_bounds = array<i64: 1>, scalar_prefetch = 0 : i64, scratch_operands = 0 : i64, tpu.core_type = #tpu.core_type<tc>, window_params = [{pipeline_mode = #tpu.pipeline_mode<synchronous>, transform_indices = @transform_0, window_bounds = array<i64: 1, 2048>}, {pipeline_mode = #tpu.pipeline_mode<synchronous>, transform_indices = @transform_1, window_bounds = array<i64: 1, 2048>}]} {
    %c0 = arith.constant 0 : index
    %c0_0 = arith.constant 0 : index
    %0 = vector.load %arg1[%c0, %c0_0] : memref<1x2048xf32, #tpu.memory_space<vmem>>, vector<1x2048xf32>
    %c0_1 = arith.constant 0 : index
    %c0_2 = arith.constant 0 : index
    %1 = vector.load %arg2[%c0_1, %c0_2] : memref<1x2048xf32, #tpu.memory_space<vmem>>, vector<1x2048xf32>
    tpu.vector_store %arg2[%c0_1, %c0_2], %0 {strides = array<i32>} : memref<1x2048xf32, #tpu.memory_space<vmem>>, vector<1x2048xf32>,
    return
  }
  func.func @transform_0(%arg0: i32) -> (i32, i32) {
    %c0_i32 = arith.constant 0 : i32
    %c0_i32_0 = arith.constant 0 : i32
    %c0_i32_1 = arith.constant 0 : i32
    return %c0_i32, %c0_i32_0 : i32, i32
  }
  func.func @transform_1(%arg0: i32) -> (i32, i32) {
    %c0_i32 = arith.constant 0 : i32
    %c0_i32_0 = arith.constant 0 : i32
    %c0_i32_1 = arith.constant 0 : i32
    return %c0_i32, %c0_i32_0 : i32, i32
  }
}

</mosaic_0001>

<llo_original>
// kernel: tpu_custom_call.1
$region0: #{tpu_custom_call.1}
  #allocation0 [shape = 'u32[]', space=smem, size = 0x4, offset = 0x4, fixed_abs, tag = 'smem constant byte address 0x4 - core index']
  #allocation1 [shape = 'u32[144,128]{1,0:T(1,128)}', space=vmem, size = 0x12000, scoped, tag = 'internal scratch']
  %s0 = inlined_call_operand.hbm [shape: f32[1,2048], index: 0, kind: input, shape index: {}, may-alias: {0,1}]
  %s1 = inlined_call_operand.hbm [shape: f32[1,2048], index: 1, kind: output, shape index: {}, may-alias: {0,1}]
  %s2 = sld [smem:[#allocation0]]
  $region18: #{tpu_custom_call.1} parent=0
    _
  %s4 = ssub.s32 1, %s2
  %s5 = scalar_select 0, %s4, %s2
  $region1: #{tpu_custom_call.1} parent=0
    #allocation2 [shape = 'u8[8192]{0}', space=vmem, size = 0x2000, scoped, tag = 'input window, operand 0, single buffered']
    #allocation3 [shape = 's32[1]{0}', space=sflag, size = 0x4, scoped, tag = 'scoped memory for tpu_custom_call.1']
    #allocation4 [shape = 's32[1]{0}', space=sflag, size = 0x4, scoped, tag = 'scoped memory for tpu_custom_call.1']
    #allocation5 [shape = 'u8[8192]{0}', space=vmem, size = 0x2000, scoped, tag = 'output window, operand 0, single buffered']
    %6 = vsyncpa [#allocation3], 0
    %7 = vsyncpa [#allocation4], 0
    // Predicated region
    $region2: #{tpu_custom_call.1} parent=1 // pred_check
      _
    $region3: #{tpu_custom_call.1} parent=1 // pred_check_branch
      %9 = sbr.rel (0) target = $region5
    $region4: #{tpu_custom_call.1} parent=1 // pred_region
      %s11 = ssub.s32 256, 256
      %12 = vsyncadd [#allocation3], %s11
      %s14 = sshll.u32 [#allocation2], 4
      %s15 = int_to_ptr.vmem [resolvable:$true] %s14
      %17 = dma.hbm_to_vmem [thread:$0]  %s0, 256, %s15, [#allocation3]
    $region5: #{tpu_custom_call.1} parent=1 // pred_fallthru
      _
    // Predicated region
    $region6: #{tpu_custom_call.1} parent=1 // pred_check
      _
    $region7: #{tpu_custom_call.1} parent=1 // pred_check_branch
      %19 = sbr.rel (0) target = $region9
    $region8: #{tpu_custom_call.1} parent=1 // pred_region
      %20 = dma.done [#allocation3], 256
    $region9: #{tpu_custom_call.1} parent=1 // pred_fallthru
      _
    %v21 = vld [vmem:[#allocation2] sm:$0xff]
    %v22 = vld [vmem:[#allocation2 + $0x8] sm:$0xff]
    %23 = vst [vmem:[#allocation5] sm:$0xff] %v21
    %24 = vst [vmem:[#allocation5 + $0x8] sm:$0xff] %v22
    // Predicated region
    $region10: #{tpu_custom_call.1} parent=1 // pred_check
      _
    $region11: #{tpu_custom_call.1} parent=1 // pred_check_branch
      %26 = sbr.rel (0) target = $region13
    $region12: #{tpu_custom_call.1} parent=1 // pred_region
      %s28 = ssub.s32 256, 256
      %29 = vsyncadd [#allocation4], %s28
      %s31 = sshll.u32 [#allocation5], 4
      %s32 = int_to_ptr.vmem [resolvable:$true] %s31
      %34 = dma.vmem_to_hbm [thread:$0]  %s32, 256, %s1, [#allocation4]
    $region13: #{tpu_custom_call.1} parent=1 // pred_fallthru
      _
    // Predicated region
    $region14: #{tpu_custom_call.1} parent=1 // pred_check
      _
    $region15: #{tpu_custom_call.1} parent=1 // pred_check_branch
      %36 = sbr.rel (0) target = $region17
    $region16: #{tpu_custom_call.1} parent=1 // pred_region
      %37 = dma.done [#allocation4], 256
    $region17: #{tpu_custom_call.1} parent=1 // pred_fallthru
      _
    %38 = vsyncpa [#allocation3], 1
    %39 = vsyncpa [#allocation4], 1

</llo_original>
